<compile_context>
chip_gen: v6e
topology: v6e:2x2x1
jax: 0.10.0
libtpu: 0.0.40
codegen_flags: <defaults>
</compile_context>

<pallas_src>
import functools

import jax
import jax.numpy as jnp
import numpy as np
from jax.experimental import pallas as pl
from jax.experimental.pallas import tpu as pltpu

LANE = 128            # lane width
MAX_BLOCK_ROWS = 1024  # 1024 x 128 f32 = 512 KiB per input per pipeline buffer
NUM_PARTIALS = 2      # per-core partial accumulators (v7x has 2 TensorCores)


def _wmse_kernel(p_ref, t_ref, w_ref, out_ref, *, tm, inner, valid_rows):
    """Accumulate four (8, LANE) partial reductions into the resident output
    block:
      [0] sum(scale where weights > 0)
      [1] count(weights > 0)
      [2] count(scale != 0)
      [3] sum(scale)
    """
    c = pl.program_id(0)   # per-core partial ("parallel")
    i = pl.program_id(1)   # row-block sweep ("arbitrary")

    @pl.when(i == 0)
    def _init():
        out_ref[...] = jnp.zeros_like(out_ref)

    # Logical (unclamped) block id: the index_map clamps the DMA to the last
    # real block; the row mask below zeroes any duplicated / OOB rows.
    blk = c * inner + i
    row0 = blk * tm
    row_idx = jax.lax.broadcasted_iota(jnp.int32, (tm, LANE), 0) + row0
    valid = row_idx < valid_rows

    p = p_ref[...].astype(jnp.float32)
    t = t_ref[...].astype(jnp.float32)
    w = w_ref[...].astype(jnp.float32)

    diff = p - t
    scale = w * diff * diff                      # weights * (pred - target)**2
    pos = jnp.logical_and(valid, w > 0.0)        # weights > 0
    nz = jnp.logical_and(valid, scale != 0.0)    # scale != 0

    def fold(x):
        # (tm, LANE) -> (8, LANE): vreg-wise adds on the VPU (no cross-lane).
        return x.reshape(tm // 8, 8, LANE).sum(axis=0)

    out_ref[0, 0] += fold(jnp.where(pos, scale, 0.0))
    out_ref[0, 1] += fold(pos.astype(jnp.float32))
    out_ref[0, 2] += fold(nz.astype(jnp.float32))
    out_ref[0, 3] += fold(jnp.where(valid, scale, 0.0))


def _flatten_lane(x):
    """Flatten to (rows, LANE) with rows a multiple of 8.  Free when
    numel % (8*LANE) == 0; otherwise pads the tail (pad contributes nothing
    to the loss because weights/pred/target pad with zeros)."""
    x = x.reshape(-1)
    pad = (-x.shape[0]) % (8 * LANE)
    if pad:
        x = jnp.pad(x, (0, pad))
    return x.reshape(-1, LANE)


def weighted_mse_loss(affs_prediction, affs_target, affs_weights):
    n = affs_prediction.size

    p2 = _flatten_lane(affs_prediction)
    t2 = _flatten_lane(affs_target)
    w2 = _flatten_lane(affs_weights)

    rows = p2.shape[0]                       # multiple of 8 by construction
    tm = min(MAX_BLOCK_ROWS, rows)           # multiple of 8, <= rows
    num_blocks = pl.cdiv(rows, tm)
    inner = pl.cdiv(num_blocks, NUM_PARTIALS)

    def in_map(c, i):
        # Clamp so the DMA never starts past the last real block; the kernel's
        # row mask discards any duplicated work.
        return (jnp.minimum(c * inner + i, num_blocks - 1), 0)

    kernel = functools.partial(_wmse_kernel, tm=tm, inner=inner,
                               valid_rows=rows)

    itemsize = jnp.dtype(affs_prediction.dtype).itemsize
    cost = pl.CostEstimate(
        flops=8 * n,
        transcendentals=0,
        bytes_accessed=3 * rows * LANE * itemsize
        + NUM_PARTIALS * 4 * 8 * LANE * 4,
    )

    partials = pl.pallas_call(
        kernel,
        out_shape=jax.ShapeDtypeStruct((NUM_PARTIALS, 4, 8, LANE), jnp.float32),
        grid=(NUM_PARTIALS, inner),
        in_specs=[pl.BlockSpec((tm, LANE), in_map)] * 3,
        out_specs=pl.BlockSpec((1, 4, 8, LANE), lambda c, i: (c, 0, 0, 0)),
        compiler_params=pltpu.CompilerParams(
            dimension_semantics=("parallel", "arbitrary")),
        cost_estimate=cost,
    )(p2, t2, w2)

    # Tiny (P, 4, 8, 128) final reduction in plain JAX.
    sums = jnp.sum(partials, axis=(0, 2, 3))
    sum_masked, cnt_pos = sums[0], sums[1]
    cnt_nonzero, sum_all = sums[2], sums[3]

    loss_masked = sum_masked / cnt_pos       # mean over weights > 0
    loss_all = sum_all / jnp.float32(n)      # mean over everything
    return jnp.where(cnt_nonzero > 0, loss_masked, loss_all)


def _reference(pred, target, weights):
    # Pure-numpy reference mirroring the PyTorch control flow.
    scale = weights * (pred - target) ** 2
    if np.count_nonzero(scale) != 0:
        return np.mean(scale[weights > 0])
    return np.mean(scale)


if __name__ == "__main__":
    # 3D affinities: (batch, 3 affinity channels, D, H, W)
    shape = (2, 3, 8, 8, 8)
    key = jax.random.PRNGKey(0)
    kp, kt, kw, km = jax.random.split(key, 4)

    pred = jax.random.normal(kp, shape, dtype=jnp.float32)
    target = jax.random.normal(kt, shape, dtype=jnp.float32)
    w_raw = jax.random.uniform(kw, shape, dtype=jnp.float32)
    keep = jax.random.uniform(km, shape) > 0.3   # ~30% zero weights
    weights = jnp.where(keep, w_raw, 0.0)

    loss = jax.block_until_ready(weighted_mse_loss(pred, target, weights))
    ref = _reference(np.asarray(pred), np.asarray(target), np.asarray(weights))
    assert np.allclose(np.asarray(loss), ref, rtol=1e-5, atol=1e-6), (loss, ref)

    # Also exercise the all-zero-scale branch (weights == 0 everywhere).
    loss_zero = jax.block_until_ready(
        weighted_mse_loss(pred, target, jnp.zeros(shape, jnp.float32)))
    assert np.allclose(np.asarray(loss_zero), 0.0, atol=1e-7)

    # A non-lane-aligned size to exercise the tail-masking / pad path.
    shape2 = (1, 3, 5, 7, 9)
    pred2 = jax.random.normal(kp, shape2, dtype=jnp.float32)
    target2 = jax.random.normal(kt, shape2, dtype=jnp.float32)
    weights2 = jnp.where(jax.random.uniform(km, shape2) > 0.3,
                         jax.random.uniform(kw, shape2, dtype=jnp.float32), 0.0)
    loss2 = jax.block_until_ready(weighted_mse_loss(pred2, target2, weights2))
    ref2 = _reference(np.asarray(pred2), np.asarray(target2),
                      np.asarray(weights2))
    assert np.allclose(np.asarray(loss2), ref2, rtol=1e-5, atol=1e-6), (loss2, ref2)

    print("KERNEL_OK")
</pallas_src>

<mosaic_0001>
module attributes {stable_mosaic.version = 11 : i64} {
  func.func @_wmse_kernel(%arg0: i32, %arg1: i32, %arg2: memref<24x128xf32, #tpu.memory_space<vmem>>, %arg3: memref<24x128xf32, #tpu.memory_space<vmem>>, %arg4: memref<24x128xf32, #tpu.memory_space<vmem>>, %arg5: memref<1x4x8x128xf32, #tpu.memory_space<vmem>>) attributes {dimension_semantics = [#tpu.dimension_semantics<parallel>, #tpu.dimension_semantics<arbitrary>], iteration_bounds = array<i64: 2, 1>, scalar_prefetch = 0 : i64, scratch_operands = 0 : i64, tpu.core_type = #tpu.core_type<tc>, window_params = [{transform_indices = @transform_0, window_bounds = array<i64: 24, 128>}, {transform_indices = @transform_1, window_bounds = array<i64: 24, 128>}, {transform_indices = @transform_2, window_bounds = array<i64: 24, 128>}, {transform_indices = @transform_3, window_bounds = array<i64: 1, 4, 8, 128>}]} {
    %c0_i32 = arith.constant 0 : i32
    %0 = arith.cmpi eq, %arg1, %c0_i32 : i32
    %1 = arith.extui %0 : i1 to i32
    %c0_i32_0 = arith.constant 0 : i32
    %2 = arith.cmpi ne, %1, %c0_i32_0 : i32
    scf.if %2 {
      %cst_43 = arith.constant 0.000000e+00 : f32
      %63 = vector.broadcast %cst_43 : f32 to vector<1x4x8x128xf32>
      %c0_44 = arith.constant 0 : index
      %c0_45 = arith.constant 0 : index
      %c0_46 = arith.constant 0 : index
      %c0_47 = arith.constant 0 : index
      %64 = vector.load %arg5[%c0_44, %c0_45, %c0_46, %c0_47] : memref<1x4x8x128xf32, #tpu.memory_space<vmem>>, vector<1x4x8x128xf32>
      tpu.vector_store %arg5[%c0_44, %c0_45, %c0_46, %c0_47], %63 {strides = array<i32>} : memref<1x4x8x128xf32, #tpu.memory_space<vmem>>, vector<1x4x8x128xf32>,
    } else {
    }
    %c1_i32 = arith.constant 1 : i32
    %3 = arith.muli %arg0, %c1_i32 : i32
    %4 = arith.addi %3, %arg1 : i32
    %c24_i32 = arith.constant 24 : i32
    %5 = arith.muli %4, %c24_i32 : i32
    %6 = tpu.iota {dimensions = array<i32: 0>} : vector<24x128xi32>
    %7 = vector.broadcast %5 : i32 to vector<24x128xi32>
    %8 = arith.addi %6, %7 : vector<24x128xi32>
    %c24_i32_1 = arith.constant 24 : i32
    %9 = vector.broadcast %c24_i32_1 : i32 to vector<24x128xi32>
    %10 = arith.cmpi slt, %8, %9 : vector<24x128xi32>
    %c0 = arith.constant 0 : index
    %c0_2 = arith.constant 0 : index
    %11 = vector.load %arg2[%c0, %c0_2] : memref<24x128xf32, #tpu.memory_space<vmem>>, vector<24x128xf32>
    %c0_3 = arith.constant 0 : index
    %c0_4 = arith.constant 0 : index
    %12 = vector.load %arg3[%c0_3, %c0_4] : memref<24x128xf32, #tpu.memory_space<vmem>>, vector<24x128xf32>
    %c0_5 = arith.constant 0 : index
    %c0_6 = arith.constant 0 : index
    %13 = vector.load %arg4[%c0_5, %c0_6] : memref<24x128xf32, #tpu.memory_space<vmem>>, vector<24x128xf32>
    %14 = arith.subf %11, %12 : vector<24x128xf32>
    %15 = arith.mulf %13, %14 : vector<24x128xf32>
    %16 = arith.mulf %15, %14 : vector<24x128xf32>
    %cst = arith.constant 0.000000e+00 : f32
    %17 = vector.broadcast %cst : f32 to vector<24x128xf32>
    %18 = arith.cmpf ogt, %13, %17 : vector<24x128xf32>
    %19 = arith.andi %10, %18 : vector<24x128xi1>
    %cst_7 = arith.constant 0.000000e+00 : f32
    %20 = vector.broadcast %cst_7 : f32 to vector<24x128xf32>
    %21 = arith.cmpf one, %16, %20 : vector<24x128xf32>
    %22 = arith.andi %10, %21 : vector<24x128xi1>
    %c0_8 = arith.constant 0 : index
    %c0_9 = arith.constant 0 : index
    %c0_10 = arith.constant 0 : index
    %c0_11 = arith.constant 0 : index
    %23 = vector.load %arg5[%c0_8, %c0_9, %c0_10, %c0_11] : memref<1x4x8x128xf32, #tpu.memory_space<vmem>>, vector<1x1x8x128xf32>
    %24 = vector.shape_cast %23 : vector<1x1x8x128xf32> to vector<8x128xf32>
    %cst_12 = arith.constant 0.000000e+00 : f32
    %25 = vector.broadcast %cst_12 : f32 to vector<24x128xf32>
    %26 = arith.select %19, %16, %25 : vector<24x128xi1>, vector<24x128xf32>
    %27 = vector.shape_cast %26 : vector<24x128xf32> to vector<3x8x128xf32>
    %cst_13 = arith.constant dense<0.000000e+00> : vector<8x128xf32>
    %28 = vector.multi_reduction <add>, %27, %cst_13 [0] : vector<3x8x128xf32> to vector<8x128xf32>
    %29 = arith.addf %24, %28 : vector<8x128xf32>
    %c0_14 = arith.constant 0 : index
    %c0_15 = arith.constant 0 : index
    %c0_16 = arith.constant 0 : index
    %c0_17 = arith.constant 0 : index
    %30 = vector.load %arg5[%c0_14, %c0_15, %c0_16, %c0_17] : memref<1x4x8x128xf32, #tpu.memory_space<vmem>>, vector<1x1x8x128xf32>
    %31 = vector.shape_cast %30 : vector<1x1x8x128xf32> to vector<8x128xf32>
    %32 = vector.shape_cast %29 : vector<8x128xf32> to vector<1x1x8x128xf32>
    tpu.vector_store %arg5[%c0_14, %c0_15, %c0_16, %c0_17], %32 {strides = array<i32>} : memref<1x4x8x128xf32, #tpu.memory_space<vmem>>, vector<1x1x8x128xf32>,
    %c0_18 = arith.constant 0 : index
    %c1 = arith.constant 1 : index
    %c0_19 = arith.constant 0 : index
    %c0_20 = arith.constant 0 : index
    %33 = vector.load %arg5[%c0_18, %c1, %c0_19, %c0_20] : memref<1x4x8x128xf32, #tpu.memory_space<vmem>>, vector<1x1x8x128xf32>
    %34 = vector.shape_cast %33 : vector<1x1x8x128xf32> to vector<8x128xf32>
    %35 = arith.extui %19 : vector<24x128xi1> to vector<24x128xi32>
    %36 = arith.sitofp %35 : vector<24x128xi32> to vector<24x128xf32>
    %37 = vector.shape_cast %36 : vector<24x128xf32> to vector<3x8x128xf32>
    %cst_21 = arith.constant dense<0.000000e+00> : vector<8x128xf32>
    %38 = vector.multi_reduction <add>, %37, %cst_21 [0] : vector<3x8x128xf32> to vector<8x128xf32>
    %39 = arith.addf %34, %38 : vector<8x128xf32>
    %c0_22 = arith.constant 0 : index
    %c1_23 = arith.constant 1 : index
    %c0_24 = arith.constant 0 : index
    %c0_25 = arith.constant 0 : index
    %40 = vector.load %arg5[%c0_22, %c1_23, %c0_24, %c0_25] : memref<1x4x8x128xf32, #tpu.memory_space<vmem>>, vector<1x1x8x128xf32>
    %41 = vector.shape_cast %40 : vector<1x1x8x128xf32> to vector<8x128xf32>
    %42 = vector.shape_cast %39 : vector<8x128xf32> to vector<1x1x8x128xf32>
    tpu.vector_store %arg5[%c0_22, %c1_23, %c0_24, %c0_25], %42 {strides = array<i32>} : memref<1x4x8x128xf32, #tpu.memory_space<vmem>>, vector<1x1x8x128xf32>,
    %c0_26 = arith.constant 0 : index
    %c2 = arith.constant 2 : index
    %c0_27 = arith.constant 0 : index
    %c0_28 = arith.constant 0 : index
    %43 = vector.load %arg5[%c0_26, %c2, %c0_27, %c0_28] : memref<1x4x8x128xf32, #tpu.memory_space<vmem>>, vector<1x1x8x128xf32>
    %44 = vector.shape_cast %43 : vector<1x1x8x128xf32> to vector<8x128xf32>
    %45 = arith.extui %22 : vector<24x128xi1> to vector<24x128xi32>
    %46 = arith.sitofp %45 : vector<24x128xi32> to vector<24x128xf32>
    %47 = vector.shape_cast %46 : vector<24x128xf32> to vector<3x8x128xf32>
    %cst_29 = arith.constant dense<0.000000e+00> : vector<8x128xf32>
    %48 = vector.multi_reduction <add>, %47, %cst_29 [0] : vector<3x8x128xf32> to vector<8x128xf32>
    %49 = arith.addf %44, %48 : vector<8x128xf32>
    %c0_30 = arith.constant 0 : index
    %c2_31 = arith.constant 2 : index
    %c0_32 = arith.constant 0 : index
    %c0_33 = arith.constant 0 : index
    %50 = vector.load %arg5[%c0_30, %c2_31, %c0_32, %c0_33] : memref<1x4x8x128xf32, #tpu.memory_space<vmem>>, vector<1x1x8x128xf32>
    %51 = vector.shape_cast %50 : vector<1x1x8x128xf32> to vector<8x128xf32>
    %52 = vector.shape_cast %49 : vector<8x128xf32> to vector<1x1x8x128xf32>
    tpu.vector_store %arg5[%c0_30, %c2_31, %c0_32, %c0_33], %52 {strides = array<i32>} : memref<1x4x8x128xf32, #tpu.memory_space<vmem>>, vector<1x1x8x128xf32>,
    %c0_34 = arith.constant 0 : index
    %c3 = arith.constant 3 : index
    %c0_35 = arith.constant 0 : index
    %c0_36 = arith.constant 0 : index
    %53 = vector.load %arg5[%c0_34, %c3, %c0_35, %c0_36] : memref<1x4x8x128xf32, #tpu.memory_space<vmem>>, vector<1x1x8x128xf32>
    %54 = vector.shape_cast %53 : vector<1x1x8x128xf32> to vector<8x128xf32>
    %cst_37 = arith.constant 0.000000e+00 : f32
    %55 = vector.broadcast %cst_37 : f32 to vector<24x128xf32>
    %56 = arith.select %10, %16, %55 : vector<24x128xi1>, vector<24x128xf32>
    %57 = vector.shape_cast %56 : vector<24x128xf32> to vector<3x8x128xf32>
    %cst_38 = arith.constant dense<0.000000e+00> : vector<8x128xf32>
    %58 = vector.multi_reduction <add>, %57, %cst_38 [0] : vector<3x8x128xf32> to vector<8x128xf32>
    %59 = arith.addf %54, %58 : vector<8x128xf32>
    %c0_39 = arith.constant 0 : index
    %c3_40 = arith.constant 3 : index
    %c0_41 = arith.constant 0 : index
    %c0_42 = arith.constant 0 : index
    %60 = vector.load %arg5[%c0_39, %c3_40, %c0_41, %c0_42] : memref<1x4x8x128xf32, #tpu.memory_space<vmem>>, vector<1x1x8x128xf32>
    %61 = vector.shape_cast %60 : vector<1x1x8x128xf32> to vector<8x128xf32>
    %62 = vector.shape_cast %59 : vector<8x128xf32> to vector<1x1x8x128xf32>
    tpu.vector_store %arg5[%c0_39, %c3_40, %c0_41, %c0_42], %62 {strides = array<i32>} : memref<1x4x8x128xf32, #tpu.memory_space<vmem>>, vector<1x1x8x128xf32>,
    return
  }
  func.func @transform_0(%arg0: i32, %arg1: i32) -> (i32, i32) {
    %c1_i32 = arith.constant 1 : i32
    %0 = arith.muli %arg0, %c1_i32 : i32
    %1 = arith.addi %0, %arg1 : i32
    %c0_i32 = arith.constant 0 : i32
    %2 = arith.minsi %1, %c0_i32 : i32
    %c0_i32_0 = arith.constant 0 : i32
    %c0_i32_1 = arith.constant 0 : i32
    return %2, %c0_i32_0 : i32, i32
  }
  func.func @transform_1(%arg0: i32, %arg1: i32) -> (i32, i32) {
    %c1_i32 = arith.constant 1 : i32
    %0 = arith.muli %arg0, %c1_i32 : i32
    %1 = arith.addi %0, %arg1 : i32
    %c0_i32 = arith.constant 0 : i32
    %2 = arith.minsi %1, %c0_i32 : i32
    %c0_i32_0 = arith.constant 0 : i32
    %c0_i32_1 = arith.constant 0 : i32
    return %2, %c0_i32_0 : i32, i32
  }
  func.func @transform_2(%arg0: i32, %arg1: i32) -> (i32, i32) {
    %c1_i32 = arith.constant 1 : i32
    %0 = arith.muli %arg0, %c1_i32 : i32
    %1 = arith.addi %0, %arg1 : i32
    %c0_i32 = arith.constant 0 : i32
    %2 = arith.minsi %1, %c0_i32 : i32
    %c0_i32_0 = arith.constant 0 : i32
    %c0_i32_1 = arith.constant 0 : i32
    return %2, %c0_i32_0 : i32, i32
  }
  func.func @transform_3(%arg0: i32, %arg1: i32) -> (i32, i32, i32, i32) {
    %c0_i32 = arith.constant 0 : i32
    %c0_i32_0 = arith.constant 0 : i32
    %c0_i32_1 = arith.constant 0 : i32
    %c0_i32_2 = arith.constant 0 : i32
    return %arg0, %c0_i32, %c0_i32_0, %c0_i32_1 : i32, i32, i32, i32
  }
}

</mosaic_0001>

<llo_original>
// kernel: tpu_custom_call.1
$region0: #{tpu_custom_call.1}
  #allocation0 [shape = 'u32[]', space=smem, size = 0x4, offset = 0x4, fixed_abs, tag = 'smem constant byte address 0x4 - core index']
  #allocation1 [shape = 'u32[144,128]{1,0:T(1,128)}', space=vmem, size = 0x12000, scoped, tag = 'internal scratch']
  %s0 = inlined_call_operand.hbm [shape: f32[24,128], index: 0, kind: input, shape index: {}]
  %s1 = inlined_call_operand.hbm [shape: f32[24,128], index: 1, kind: input, shape index: {}]
  %s2 = inlined_call_operand.hbm [shape: f32[24,128], index: 2, kind: input, shape index: {}]
  %s3 = inlined_call_operand.hbm [shape: f32[2,4,8,128], index: 3, kind: output, shape index: {}]
  %s4 = sld [smem:[#allocation0]]
  $region61: #{tpu_custom_call.1} parent=0
    _
  %s6 = ssub.s32 1, %s4
  %s7 = scalar_select 0, %s6, %s4
  $region1: #{tpu_custom_call.1} parent=0
    #allocation2 [shape = 'u8[24576]{0}', space=vmem, size = 0x6000, scoped, tag = 'input window, operand 0']
    #allocation3 [shape = 's32[2]{0}', space=sflag, size = 0x8, scoped, tag = 'scoped memory for tpu_custom_call.1']
    #allocation4 [shape = 's32[2]{0}', space=sflag, size = 0x8, scoped, tag = 'scoped memory for tpu_custom_call.1']
    #allocation5 [shape = 'u8[24576]{0}', space=vmem, size = 0x6000, scoped, tag = 'input window, operand 1']
    #allocation6 [shape = 's32[2]{0}', space=sflag, size = 0x8, scoped, tag = 'scoped memory for tpu_custom_call.1']
    #allocation7 [shape = 'u8[24576]{0}', space=vmem, size = 0x6000, scoped, tag = 'input window, operand 2']
    #allocation8 [shape = 'u8[32768]{0}', space=vmem, size = 0x8000, scoped, tag = 'output window, operand 0']
    %8 = vsyncpa [#allocation3], 0
    %s9 = scalar_lea.sflag [#allocation3], 1
    %10 = vsyncpa %s9, 0
    %11 = vsyncpa [#allocation6], 0
    %s12 = scalar_lea.sflag [#allocation6], 1
    %13 = vsyncpa %s12, 0
    %14 = vsyncpa [#allocation4], 0
    %s15 = scalar_lea.sflag [#allocation4], 1
    %16 = vsyncpa %s15, 0
    loop: start=0, step=1, limit=4
    $region2: #{tpu_custom_call.1} parent=1 // loop_pre_header
      _
    $region3: #{tpu_custom_call.1} parent=1 // loop_header
      %s18 = sphi 0, %s22
      %p19 = scmp.ge.s32.totalorder %s18, 4
      %s25 = sphi 0, %s37
      %s26 = sphi 0, %s33
      %s27 = sphi 0, %s25
      %s28 = sphi 0, %s26
      %s29 = sphi 0, %s27
      %s30 = sphi 0, %s28
      %s46 = sphi 0, %s48
      %s49 = sphi 0, %s46
      %s50 = sphi 0, %s49
      %s66 = sphi 0, %s50
      %s78 = sphi 0, %s80
      %s81 = sphi 0, %s78
      %s82 = sphi 0, %s81
      %s98 = sphi 0, %s82
      %s110 = sphi 0, %s112
      %s113 = sphi 0, %s110
      %s114 = sphi 0, %s113
      %s130 = sphi 0, %s114
      %s136 = sphi 0, %s138
      %s139 = sphi 0, %s136
      %s140 = sphi 0, %s139
      %s156 = sphi 0, %s140
    $region4: #{tpu_custom_call.1} parent=1 // loop_header_branch
      %21 = sbr.rel (%p19) target = $region8
    $region5: #{tpu_custom_call.1} parent=1 // loop_body
      %s23 = ssub.s32 %s18, 1
      %s24 = ssub.s32 %s18, 2
      %s31 = sadd.s32 1, %s26
      %p32 = scmp.ge.s32.totalorder %s31, 1
      %s33 = scalar_select %p32, 0, %s31
      %s34 = sadd.s32 1, %s25
      %s35 = scalar_select %p32, %s34, %s25
      %p36 = scmp.ge.s32.totalorder %s35, 2
      %s37 = scalar_select %p36, 0, %s35
      %s38 = sadd.s32 %s25, %s26
      %p39 = scmp.lt.s32.totalorder %s38, 0
      %s40 = scalar_select %p39, %s38, 0
      %s41 = sadd.s32 %s37, %s33
      %p42 = scmp.lt.s32.totalorder %s41, 0
      %s43 = scalar_select %p42, %s41, 0
      %s44 = ssub.s32 %s40, %s43
      %p45 = scmp.eq.s32.totalorder %s44, 0
      %s47 = sadd.s32 %s46, 1
      %s48 = scalar_select %p45, %s46, %s47
      %p51 = pneg %p45
      %p52 = scmp.eq.s32.totalorder %s18, 1
      %p53 = por %p51, %p52
      %p54 = scmp.ne.s32.totalorder %s46, %s49
      %p55 = scmp.eq.s32.totalorder %s18, 0
      %p56 = por %p54, %p55
      %p57 = scmp.ne.s32.totalorder %s46, %s49
      %p58 = scmp.eq.s32.totalorder %s23, 1
      %p59 = por %p57, %p58
      %p60 = scmp.ne.s32.totalorder %s49, %s50
      %p61 = scmp.eq.s32.totalorder %s23, 0
      %p62 = por %p60, %p61
      %p63 = scmp.ne.s32.totalorder %s49, %s50
      %p64 = scmp.eq.s32.totalorder %s24, 1
      %p65 = por %p63, %p64
      %p67 = scmp.ne.s32.totalorder %s50, %s66
      %p68 = scmp.eq.s32.totalorder %s24, 0
      %p69 = por %p67, %p68
      %s70 = sadd.s32 %s25, %s26
      %p71 = scmp.lt.s32.totalorder %s70, 0
      %s72 = scalar_select %p71, %s70, 0
      %s73 = sadd.s32 %s37, %s33
      %p74 = scmp.lt.s32.totalorder %s73, 0
      %s75 = scalar_select %p74, %s73, 0
      %s76 = ssub.s32 %s72, %s75
      %p77 = scmp.eq.s32.totalorder %s76, 0
      %s79 = sadd.s32 %s78, 1
      %s80 = scalar_select %p77, %s78, %s79
      %p83 = pneg %p77
      %p84 = scmp.eq.s32.totalorder %s18, 1
      %p85 = por %p83, %p84
      %p86 = scmp.ne.s32.totalorder %s78, %s81
      %p87 = scmp.eq.s32.totalorder %s18, 0
      %p88 = por %p86, %p87
      %p89 = scmp.ne.s32.totalorder %s78, %s81
      %p90 = scmp.eq.s32.totalorder %s23, 1
      %p91 = por %p89, %p90
      %p92 = scmp.ne.s32.totalorder %s81, %s82
      %p93 = scmp.eq.s32.totalorder %s23, 0
      %p94 = por %p92, %p93
      %p95 = scmp.ne.s32.totalorder %s81, %s82
      %p96 = scmp.eq.s32.totalorder %s24, 1
      %p97 = por %p95, %p96
      %p99 = scmp.ne.s32.totalorder %s82, %s98
      %p100 = scmp.eq.s32.totalorder %s24, 0
      %p101 = por %p99, %p100
      %s102 = sadd.s32 %s25, %s26
      %p103 = scmp.lt.s32.totalorder %s102, 0
      %s104 = scalar_select %p103, %s102, 0
      %s105 = sadd.s32 %s37, %s33
      %p106 = scmp.lt.s32.totalorder %s105, 0
      %s107 = scalar_select %p106, %s105, 0
      %s108 = ssub.s32 %s104, %s107
      %p109 = scmp.eq.s32.totalorder %s108, 0
      %s111 = sadd.s32 %s110, 1
      %s112 = scalar_select %p109, %s110, %s111
      %p115 = pneg %p109
      %p116 = scmp.eq.s32.totalorder %s18, 1
      %p117 = por %p115, %p116
      %p118 = scmp.ne.s32.totalorder %s110, %s113
      %p119 = scmp.eq.s32.totalorder %s18, 0
      %p120 = por %p118, %p119
      %p121 = scmp.ne.s32.totalorder %s110, %s113
      %p122 = scmp.eq.s32.totalorder %s23, 1
      %p123 = por %p121, %p122
      %p124 = scmp.ne.s32.totalorder %s113, %s114
      %p125 = scmp.eq.s32.totalorder %s23, 0
      %p126 = por %p124, %p125
      %p127 = scmp.ne.s32.totalorder %s113, %s114
      %p128 = scmp.eq.s32.totalorder %s24, 1
      %p129 = por %p127, %p128
      %p131 = scmp.ne.s32.totalorder %s114, %s130
      %p132 = scmp.eq.s32.totalorder %s24, 0
      %p133 = por %p131, %p132
      %s134 = ssub.s32 %s25, %s37
      %p135 = scmp.eq.s32.totalorder %s134, 0
      %s137 = sadd.s32 %s136, 1
      %s138 = scalar_select %p135, %s136, %s137
      %p141 = pneg %p135
      %p142 = scmp.eq.s32.totalorder %s18, 1
      %p143 = por %p141, %p142
      %p144 = scmp.ne.s32.totalorder %s136, %s139
      %p145 = scmp.eq.s32.totalorder %s18, 0
      %p146 = por %p144, %p145
      %p147 = scmp.ne.s32.totalorder %s136, %s139
      %p148 = scmp.eq.s32.totalorder %s23, 1
      %p149 = por %p147, %p148
      %p150 = scmp.ne.s32.totalorder %s139, %s140
      %p151 = scmp.eq.s32.totalorder %s23, 0
      %p152 = por %p150, %p151
      %p153 = scmp.ne.s32.totalorder %s139, %s140
      %p154 = scmp.eq.s32.totalorder %s24, 1
      %p155 = por %p153, %p154
      %p157 = scmp.ne.s32.totalorder %s140, %s156
      %p158 = scmp.eq.s32.totalorder %s24, 0
      %p159 = por %p157, %p158
      %p160 = scmp.le.s32.totalorder 1, %s18
      %p161 = scmp.lt.s32.totalorder %s18, 3
      %p162 = pnand %p160, %p161
      %p163 = pneg %p162
      // Predicated region
      $region9: #{tpu_custom_call.1} parent=5 // pred_check
        _
      $region10: #{tpu_custom_call.1} parent=5 // pred_check_branch
        %165 = sbr.rel (%p162) target = $region12
      $region11: #{tpu_custom_call.1} parent=5 // pred_region
        %s166 = ssub.s32 %s18, 1
      $region12: #{tpu_custom_call.1} parent=5 // pred_fallthru
        _
      %p167 = scmp.lt.s32.totalorder %s18, 2
      // Predicated region
      $region13: #{tpu_custom_call.1} parent=5 // pred_check
        %p168 = pneg %p167
      $region14: #{tpu_custom_call.1} parent=5 // pred_check_branch
        %170 = sbr.rel (%p168) target = $region16
      $region15: #{tpu_custom_call.1} parent=5 // pred_region
        // Predicated region
        $region17: #{tpu_custom_call.1} parent=15 // pred_check
          %p171 = pneg %p56
        $region18: #{tpu_custom_call.1} parent=15 // pred_check_branch
          %173 = sbr.rel (%p171) target = $region20
        $region19: #{tpu_custom_call.1} parent=15 // pred_region
          %s174 = sand.u32 %s46, 1
          %s175 = scalar_lea.sflag [#allocation3], %s174
          %s176 = sand.u32 %s46, 1
          %s177 = smul.addr %s176, 24
          %s178 = scalar_lea.vmem [#allocation2], %s177
          %s179 = sadd.s32 %s25, %s26
          %p180 = scmp.lt.s32.totalorder %s179, 0
          %s181 = scalar_select %p180, %s179, 0
          %s182 = smul.u32 3, %s181
          %s184 = ssub.s32 384, 384
          %185 = vsyncadd %s175, %s184
          %s186 = smul.addr %s182, 128
          %s187 = scalar_lea.hbm %s0, %s186
          %s188 = sshll.u32 %s178, 4
          %s189 = int_to_ptr.vmem [resolvable:$true] %s188
          %194 = dma.hbm_to_vmem [thread:$0]  %s187, 384, %s189, %s175, 128, 128, 8
        $region20: #{tpu_custom_call.1} parent=15 // pred_fallthru
          _
        // Predicated region
        $region21: #{tpu_custom_call.1} parent=15 // pred_check
          %p195 = pneg %p88
        $region22: #{tpu_custom_call.1} parent=15 // pred_check_branch
          %197 = sbr.rel (%p195) target = $region24
        $region23: #{tpu_custom_call.1} parent=15 // pred_region
          %s198 = sand.u32 %s18, 1
          %s199 = scalar_lea.sflag [#allocation6], %s198
          %s200 = sand.u32 %s78, 1
          %s201 = smul.addr %s200, 24
          %s202 = scalar_lea.vmem [#allocation5], %s201
          %s203 = sadd.s32 %s25, %s26
          %p204 = scmp.lt.s32.totalorder %s203, 0
          %s205 = scalar_select %p204, %s203, 0
          %s206 = smul.u32 3, %s205
          %s208 = ssub.s32 384, 384
          %209 = vsyncadd %s199, %s208
          %s210 = smul.addr %s206, 128
          %s211 = scalar_lea.hbm %s1, %s210
          %s212 = sshll.u32 %s202, 4
          %s213 = int_to_ptr.vmem [resolvable:$true] %s212
          %218 = dma.hbm_to_vmem [thread:$0]  %s211, 384, %s213, %s199, 128, 128, 8
        $region24: #{tpu_custom_call.1} parent=15 // pred_fallthru
          _
        // Predicated region
        $region25: #{tpu_custom_call.1} parent=15 // pred_check
          %p219 = pneg %p120
        $region26: #{tpu_custom_call.1} parent=15 // pred_check_branch
          %221 = sbr.rel (%p219) target = $region28
        $region27: #{tpu_custom_call.1} parent=15 // pred_region
          %s222 = sand.u32 %s18, 1
          %s223 = scalar_lea.sflag [#allocation6], %s222
          %s224 = sand.u32 %s110, 1
          %s225 = smul.addr %s224, 24
          %s226 = scalar_lea.vmem [#allocation7], %s225
          %s227 = sadd.s32 %s25, %s26
          %p228 = scmp.lt.s32.totalorder %s227, 0
          %s229 = scalar_select %p228, %s227, 0
          %s230 = smul.u32 3, %s229
          %s232 = ssub.s32 384, 384
          %233 = vsyncadd %s223, %s232
          %s234 = smul.addr %s230, 128
          %s235 = scalar_lea.hbm %s2, %s234
          %s236 = sshll.u32 %s226, 4
          %s237 = int_to_ptr.vmem [resolvable:$true] %s236
          %242 = dma.hbm_to_vmem [thread:$0]  %s235, 384, %s237, %s223, 128, 128, 8
        $region28: #{tpu_custom_call.1} parent=15 // pred_fallthru
          _
      $region16: #{tpu_custom_call.1} parent=5 // pred_fallthru
        _
      %p243 = scmp.le.s32.totalorder 1, %s18
      %p244 = scmp.lt.s32.totalorder %s18, 3
      %p245 = pnand %p243, %p244
      %p246 = pneg %p245
      // Predicated region
      $region29: #{tpu_custom_call.1} parent=5 // pred_check
        _
      $region30: #{tpu_custom_call.1} parent=5 // pred_check_branch
        %248 = sbr.rel (%p245) target = $region32
      $region31: #{tpu_custom_call.1} parent=5 // pred_region
        %s249 = ssub.s32 %s18, 1
        %s250 = sand.u32 %s49, 1
        %s251 = scalar_lea.sflag [#allocation3], %s250
        %s252 = sand.u32 %s49, 1
        %s253 = smul.addr %s252, 24
        %s254 = scalar_lea.vmem [#allocation2], %s253
        // Predicated region
        $region33: #{tpu_custom_call.1} parent=31 // pred_check
          %p255 = pneg %p62
        $region34: #{tpu_custom_call.1} parent=31 // pred_check_branch
          %257 = sbr.rel (%p255) target = $region36
        $region35: #{tpu_custom_call.1} parent=31 // pred_region
          %258 = dma.done %s251, 384
        $region36: #{tpu_custom_call.1} parent=31 // pred_fallthru
          _
        %s259 = sand.u32 %s23, 1
        %s260 = scalar_lea.sflag [#allocation6], %s259
        %s261 = sand.u32 %s81, 1
        %s262 = smul.addr %s261, 24
        %s263 = scalar_lea.vmem [#allocation5], %s262
        // Predicated region
        $region37: #{tpu_custom_call.1} parent=31 // pred_check
          %p264 = pneg %p94
        $region38: #{tpu_custom_call.1} parent=31 // pred_check_branch
          %266 = sbr.rel (%p264) target = $region40
        $region39: #{tpu_custom_call.1} parent=31 // pred_region
          %267 = dma.done %s260, 384
        $region40: #{tpu_custom_call.1} parent=31 // pred_fallthru
          _
        %s268 = sand.u32 %s23, 1
        %s269 = scalar_lea.sflag [#allocation6], %s268
        %s270 = sand.u32 %s113, 1
        %s271 = smul.addr %s270, 24
        %s272 = scalar_lea.vmem [#allocation7], %s271
        // Predicated region
        $region41: #{tpu_custom_call.1} parent=31 // pred_check
          %p273 = pneg %p126
        $region42: #{tpu_custom_call.1} parent=31 // pred_check_branch
          %275 = sbr.rel (%p273) target = $region44
        $region43: #{tpu_custom_call.1} parent=31 // pred_region
          %276 = dma.done %s269, 384
        $region44: #{tpu_custom_call.1} parent=31 // pred_fallthru
          _
        %s277 = sand.u32 %s49, 1
        %s278 = scalar_lea.sflag [#allocation3], %s277
        %s279 = sand.u32 %s49, 1
        %s280 = smul.addr %s279, 24
        %s281 = scalar_lea.vmem [#allocation2], %s280
        %p282 = pneg %p62
        %p283 = pneg %p59
        %s284 = sand.u32 %s23, 1
        %s285 = scalar_lea.sflag [#allocation6], %s284
        %s286 = sand.u32 %s81, 1
        %s287 = smul.addr %s286, 24
        %s288 = scalar_lea.vmem [#allocation5], %s287
        %p289 = pneg %p94
        %p290 = pneg %p91
        %s291 = sand.u32 %s23, 1
        %s292 = scalar_lea.sflag [#allocation6], %s291
        %s293 = sand.u32 %s113, 1
        %s294 = smul.addr %s293, 24
        %s295 = scalar_lea.vmem [#allocation7], %s294
        %p296 = pneg %p126
        %p297 = pneg %p123
        %p298 = pneg %p152
        %p299 = pneg %p149
        %s300 = sand.u32 %s139, 1
        %s301 = scalar_lea.sflag [#allocation4], %s300
        %s302 = sand.u32 %s139, 1
        %s303 = smul.addr %s302, 32
        %s304 = scalar_lea.vmem [#allocation8], %s303
        %s305 = sadd.s32 %s27, %s28
        %p306 = scmp.lt.s32.totalorder %s305, 0
        %s307 = scalar_select %p306, %s305, 0
        %s308 = smul.u32 3, %s307
        %s309 = sadd.s32 %s27, %s28
        %p310 = scmp.lt.s32.totalorder %s309, 0
        %s311 = scalar_select %p310, %s309, 0
        %s312 = smul.u32 3, %s311
        %s313 = sadd.s32 %s27, %s28
        %p314 = scmp.lt.s32.totalorder %s313, 0
        %s315 = scalar_select %p314, %s313, 0
        %s316 = smul.u32 3, %s315
        %p317 = scmp.eq.s32.totalorder %s28, 0
        // Predicated region
        $region45: #{tpu_custom_call.1} parent=31 // pred_check
          %p318 = pneg %p317
        $region46: #{tpu_custom_call.1} parent=31 // pred_check_branch
          %320 = sbr.rel (%p318) target = $region48
        $region47: #{tpu_custom_call.1} parent=31 // pred_region
          %321 = vst [vmem:[%s304] sm:$0xff] 0.0
          %322 = vst [vmem:[%s304 + $0x8] sm:$0xff] 0.0
          %323 = vst [vmem:[%s304 + $0x10] sm:$0xff] 0.0
          %324 = vst [vmem:[%s304 + $0x18] sm:$0xff] 0.0
        $region48: #{tpu_custom_call.1} parent=31 // pred_fallthru
          _
        %s325 = sadd.s32 %s27, %s28
        %s326 = smul.u32 %s325, 24
        %v327 = vlaneseq
        %v328 = vshrl.u32 %v327, 7
        %v329 = vadd.s32 %v328, 8
        %v330 = vadd.s32 %v328, 16
        %v331 = vstv %s326
        %v332 = vadd.s32 %v328, %v331
        %v333 = vadd.s32 %v329, %v331
        %v334 = vadd.s32 %v330, %v331
        %vm335 = vcmp.lt.s32.totalorder %v332, 24
        %vm336 = vcmp.lt.s32.totalorder %v333, 24
        %vm337 = vcmp.lt.s32.totalorder %v334, 24
        %v338 = vld [vmem:[%s254] sm:$0xff]
        %v339 = vld [vmem:[%s254 + $0x8] sm:$0xff]
        %v340 = vld [vmem:[%s254 + $0x10] sm:$0xff]
        %v341 = vld [vmem:[%s263] sm:$0xff]
        %v342 = vld [vmem:[%s263 + $0x8] sm:$0xff]
        %v343 = vld [vmem:[%s263 + $0x10] sm:$0xff]
        %v344 = vld [vmem:[%s272] sm:$0xff]
        %v345 = vld [vmem:[%s272 + $0x8] sm:$0xff]
        %v346 = vld [vmem:[%s272 + $0x10] sm:$0xff]
        %v347 = vsub.f32 %v338, %v341
        %v348 = vsub.f32 %v339, %v342
        %v349 = vsub.f32 %v340, %v343
        %v350 = vmul.f32 %v344, %v347
        %v351 = vmul.f32 %v345, %v348
        %v352 = vmul.f32 %v346, %v349
        %v353 = vmul.f32 %v350, %v347
        %v354 = vmul.f32 %v351, %v348
        %v355 = vmul.f32 %v352, %v349
        %vm356 = vcmp.gt.f32.partialorder %v344, 0.0
        %vm357 = vcmp.gt.f32.partialorder %v345, 0.0
        %vm358 = vcmp.gt.f32.partialorder %v346, 0.0
        %vm359 = vmand %vm335, %vm356
        %vm360 = vmand %vm336, %vm357
        %vm361 = vmand %vm337, %vm358
        %vm362 = vcmp.ne.f32.partialorder %v353, 0.0
        %vm363 = vcmp.ne.f32.partialorder %v354, 0.0
        %vm364 = vcmp.ne.f32.partialorder %v355, 0.0
        %vm365 = vmand %vm335, %vm362
        %vm366 = vmand %vm336, %vm363
        %vm367 = vmand %vm337, %vm364
        %v368 = vld [vmem:[%s304] sm:$0xff]
        %v369 = vsel %vm359, %v353, 0.0
        %v370 = vsel %vm360, %v354, 0.0
        %v371 = vsel %vm361, %v355, 0.0
        %v372 = vadd.f32 %v369, %v370
        %v373 = vadd.f32 %v372, %v371
        %v374 = vadd.f32 %v368, %v373
        %375 = vst [vmem:[%s304] sm:$0xff] %v374
        %s376 = scalar_lea.vmem %s304, 8 [#allocation8]
        %v377 = vld [vmem:[%s376] sm:$0xff]
        %v378 = vsel %vm359, 1, 0
        %v379 = vsel %vm360, 1, 0
        %v380 = vsel %vm361, 1, 0
        %v381 = vcvt.s32.f32 %v378
        %v382 = vcvt.s32.f32 %v379
        %v383 = vcvt.s32.f32 %v380
        %v384 = vadd.f32 %v381, %v382
        %v385 = vadd.f32 %v384, %v383
        %v386 = vadd.f32 %v377, %v385
        %387 = vst [vmem:[%s376] sm:$0xff] %v386
        %s388 = scalar_lea.vmem %s304, 16 [#allocation8]
        %v389 = vld [vmem:[%s388] sm:$0xff]
        %v390 = vsel %vm365, 1, 0
        %v391 = vsel %vm366, 1, 0
        %v392 = vsel %vm367, 1, 0
        %v393 = vcvt.s32.f32 %v390
        %v394 = vcvt.s32.f32 %v391
        %v395 = vcvt.s32.f32 %v392
        %v396 = vadd.f32 %v393, %v394
        %v397 = vadd.f32 %v396, %v395
        %v398 = vadd.f32 %v389, %v397
        %399 = vst [vmem:[%s388] sm:$0xff] %v398
        %s400 = scalar_lea.vmem %s304, 24 [#allocation8]
        %v401 = vld [vmem:[%s400] sm:$0xff]
        %v402 = vsel %vm335, %v353, 0.0
        %v403 = vsel %vm336, %v354, 0.0
        %v404 = vsel %vm337, %v355, 0.0
        %v405 = vadd.f32 %v402, %v403
        %v406 = vadd.f32 %v405, %v404
        %v407 = vadd.f32 %v401, %v406
        %408 = vst [vmem:[%s400] sm:$0xff] %v407
        %s409 = sand.u32 %s139, 1
        %s410 = scalar_lea.sflag [#allocation4], %s409
        %s411 = sand.u32 %s139, 1
        %s412 = smul.addr %s411, 32
        %s413 = scalar_lea.vmem [#allocation8], %s412
        // Predicated region
        $region49: #{tpu_custom_call.1} parent=31 // pred_check
          %p414 = pneg %p149
        $region50: #{tpu_custom_call.1} parent=31 // pred_check_branch
          %416 = sbr.rel (%p414) target = $region52
        $region51: #{tpu_custom_call.1} parent=31 // pred_region
          %s418 = ssub.s32 512, 512
          %419 = vsyncadd %s410, %s418
          %s420 = smul.addr %s27, 4
          %s421 = smul.addr %s420, 128
          %s422 = scalar_lea.hbm %s3, %s421
          %s423 = sshll.u32 %s413, 4
          %s424 = int_to_ptr.vmem [resolvable:$true] %s423
          %429 = dma.vmem_to_hbm [thread:$0]  %s424, 512, %s422, %s410, 128, 128, 8
        $region52: #{tpu_custom_call.1} parent=31 // pred_fallthru
          _
      $region32: #{tpu_custom_call.1} parent=5 // pred_fallthru
        _
      %p430 = scmp.le.s32.totalorder 2, %s18
      // Predicated region
      $region53: #{tpu_custom_call.1} parent=5 // pred_check
        %p431 = pneg %p430
      $region54: #{tpu_custom_call.1} parent=5 // pred_check_branch
        %433 = sbr.rel (%p431) target = $region56
      $region55: #{tpu_custom_call.1} parent=5 // pred_region
        %s434 = ssub.s32 %s18, 2
        // Predicated region
        $region57: #{tpu_custom_call.1} parent=55 // pred_check
          %p435 = pneg %p155
        $region58: #{tpu_custom_call.1} parent=55 // pred_check_branch
          %437 = sbr.rel (%p435) target = $region60
        $region59: #{tpu_custom_call.1} parent=55 // pred_region
          %s438 = sand.u32 %s140, 1
          %s439 = scalar_lea.sflag [#allocation4], %s438
          %s440 = sand.u32 %s140, 1
          %s441 = smul.addr %s440, 32
          %s442 = scalar_lea.vmem [#allocation8], %s441
          %443 = dma.done %s439, 512
        $region60: #{tpu_custom_call.1} parent=55 // pred_fallthru
          _
      $region56: #{tpu_custom_call.1} parent=5 // pred_fallthru
        _
    $region6: #{tpu_custom_call.1} parent=1 // loop_footer
      %s22 = sadd.s32 1, %s18
    $region7: #{tpu_custom_call.1} parent=1 // loop_footer_branch
      %17 = sbr.rel target = $region3
    $region8: #{tpu_custom_call.1} parent=1 // loop_exit
      _
    %444 = vsyncpa [#allocation3], 1
    %s445 = scalar_lea.sflag [#allocation3], 1
    %446 = vsyncpa %s445, 1
    %447 = vsyncpa [#allocation6], 1
    %s448 = scalar_lea.sflag [#allocation6], 1
    %449 = vsyncpa %s448, 1
    %450 = vsyncpa [#allocation4], 1
    %s451 = scalar_lea.sflag [#allocation4], 1
    %452 = vsyncpa %s451, 1

</llo_original>
